<compile_context>
chip_gen: v6e
topology: v6e:2x2x1
jax: 0.10.0
libtpu: 0.0.40
codegen_flags: <defaults>
</compile_context>

<pallas_src>
import jax
import jax.numpy as jnp
from jax.experimental import pallas as pl
from jax.experimental.pallas import tpu as pltpu


def _constraint_loss_kernel(alpha_ref, mt_ref, mu_ref, c_ref, cons_ref):
    """Computes cons = alpha * ||relu(M @ mu - c)||^2 on tiny, fully-resident tiles.

    alpha_ref : SMEM (1,)                    f32   runtime scalar
    mt_ref    : VMEM (dim_condition, n_con)  f32   M transposed (lane-major result)
    mu_ref    : VMEM (dim_condition, 1)      f32   mu as a column (broadcast over lanes)
    c_ref     : VMEM (1, n_con)              f32   c as a lane-major row
    cons_ref  : VMEM (1, 1)                  f32   scalar loss
    """
    # torch.mv(M, mu) as broadcast-multiply + sublane reduction -> (1, n_constraints) row.
    # (Far too small for the MXU; VPU + XLU is the right path here.)
    mv = jnp.sum(mt_ref[...] * mu_ref[...], axis=0, keepdims=True)

    # gap_constraint = F.relu(M @ mu - c)
    gap = jnp.maximum(mv - c_ref[...], 0.0)

    # cons = alpha * dot(gap, gap)
    # (the p_norm != 2 branch only detaches one operand; forward value is identical)
    alpha = alpha_ref[0]
    cons_ref[...] = jnp.sum(alpha * gap * gap, keepdims=True)   # (1, 1)


def constraint_loss(X, out, sensitive, M, c, *, alpha=1.0, p_norm=2, y=None):
    """JAX/Pallas equivalent of ConstraintLoss.forward. Returns a scalar."""
    del X, p_norm  # X unused by the base-class mu_f; p_norm only affects autograd

    # sensitive.view(out.shape) / y.view(out.shape): kept for shape-validation fidelity,
    # but the base-class mu_f never consumes them (and sigmoid(out) is dead work), so
    # nothing O(batch) is passed to the kernel.
    sensitive = sensitive.reshape(out.shape)
    if y is not None:
        y = y.reshape(out.shape)

    n_constraints, dim_condition = M.shape

    # mu = mu_f(...) == zeros (see TODO above re: shape).
    mu_col = jnp.zeros((dim_condition, 1), dtype=jnp.float32)
    m_t = M.astype(jnp.float32).T                                    # (dim_condition, n_constraints)
    c_row = c.reshape(1, n_constraints).astype(jnp.float32)          # lane-major row
    alpha_arr = jnp.full((1,), alpha, dtype=jnp.float32)             # runtime scalar, no recompile

    smem_spec = pl.BlockSpec(memory_space=pltpu.MemorySpace.SMEM)
    vmem_spec = pl.BlockSpec(memory_space=pltpu.MemorySpace.VMEM)

    cons = pl.pallas_call(
        _constraint_loss_kernel,
        out_shape=jax.ShapeDtypeStruct((1, 1), jnp.float32),
        in_specs=[smem_spec, vmem_spec, vmem_spec, vmem_spec],
        out_specs=vmem_spec,
    )(alpha_arr, m_t, mu_col, c_row)

    return cons[0, 0]


if __name__ == "__main__":
    key = jax.random.PRNGKey(0)
    kx, ko, ks, km, kc = jax.random.split(key, 5)

    batch, features = 8, 32
    n_class = 2
    n_constraints = 2
    dim_condition = n_class + 1
    alpha = 1.5

    X = jax.random.normal(kx, (batch, features), dtype=jnp.float32)
    out = jax.random.normal(ko, (batch, 1), dtype=jnp.float32)          # logits
    sensitive = jax.random.bernoulli(ks, 0.5, (batch,)).astype(jnp.float32)

    # Module parameters. __init__ uses zeros; we use nonzero values here so the
    # relu / dot path is actually exercised by the correctness check.
    M = jax.random.normal(km, (n_constraints, dim_condition), dtype=jnp.float32)
    c = jax.random.normal(kc, (n_constraints,), dtype=jnp.float32)

    cons = constraint_loss(X, out, sensitive, M, c, alpha=alpha, p_norm=2)
    cons = jax.block_until_ready(cons)

    # Reference (pure JAX) check of the same forward math.
    mu_ref = jnp.zeros((dim_condition,), dtype=jnp.float32)
    gap_ref = jnp.maximum(M @ mu_ref - c, 0.0)
    cons_ref = alpha * jnp.dot(gap_ref, gap_ref)
    assert jnp.allclose(cons, cons_ref, atol=1e-6), (cons, cons_ref)

    print("KERNEL_OK")
</pallas_src>

<mosaic_0001>
module attributes {stable_mosaic.version = 11 : i64} {
  func.func @_constraint_loss_kernel(%arg0: memref<1xf32, #tpu.memory_space<smem>>, %arg1: memref<3x2xf32, #tpu.memory_space<vmem>>, %arg2: memref<3x1xf32, #tpu.memory_space<vmem>>, %arg3: memref<1x2xf32, #tpu.memory_space<vmem>>, %arg4: memref<1x1xf32, #tpu.memory_space<vmem>>) attributes {dimension_semantics = [], scalar_prefetch = 0 : i64, scratch_operands = 0 : i64, tpu.core_type = #tpu.core_type<tc>} {
    %c0 = arith.constant 0 : index
    %c0_0 = arith.constant 0 : index
    %0 = vector.load %arg1[%c0, %c0_0] : memref<3x2xf32, #tpu.memory_space<vmem>>, vector<3x2xf32>
    %c0_1 = arith.constant 0 : index
    %c0_2 = arith.constant 0 : index
    %1 = vector.load %arg2[%c0_1, %c0_2] : memref<3x1xf32, #tpu.memory_space<vmem>>, vector<3x1xf32>
    %2 = vector.broadcast %1 : vector<3x1xf32> to vector<3x2xf32>
    %3 = arith.mulf %0, %2 : vector<3x2xf32>
    %cst = arith.constant dense<0.000000e+00> : vector<2xf32>
    %4 = vector.multi_reduction <add>, %3, %cst [0] : vector<3x2xf32> to vector<2xf32>
    %5 = vector.shape_cast %4 : vector<2xf32> to vector<1x2xf32>
    %c0_3 = arith.constant 0 : index
    %c0_4 = arith.constant 0 : index
    %6 = vector.load %arg3[%c0_3, %c0_4] : memref<1x2xf32, #tpu.memory_space<vmem>>, vector<1x2xf32>
    %7 = arith.subf %5, %6 : vector<1x2xf32>
    %cst_5 = arith.constant 0.000000e+00 : f32
    %8 = vector.broadcast %cst_5 : f32 to vector<1x2xf32>
    %9 = arith.maximumf %7, %8 : vector<1x2xf32>
    %c0_6 = arith.constant 0 : index
    %10 = memref.load %arg0[%c0_6] : memref<1xf32, #tpu.memory_space<smem>>
    %11 = vector.broadcast %10 : f32 to vector<1x2xf32>
    %12 = arith.mulf %11, %9 : vector<1x2xf32>
    %13 = arith.mulf %12, %9 : vector<1x2xf32>
    %14 = vector.shape_cast %13 : vector<1x2xf32> to vector<1x1x2xf32>
    %cst_7 = arith.constant dense<0.000000e+00> : vector<1xf32>
    %15 = vector.multi_reduction <add>, %14, %cst_7 [1, 2] : vector<1x1x2xf32> to vector<1xf32>
    %16 = vector.shape_cast %15 : vector<1xf32> to vector<1x1x1xf32>
    %17 = vector.extract %16[0, 0, 0] : f32 from vector<1x1x1xf32>
    %18 = vector.broadcast %17 : f32 to vector<1x1xf32>
    %c0_8 = arith.constant 0 : index
    %c0_9 = arith.constant 0 : index
    %19 = vector.load %arg4[%c0_8, %c0_9] : memref<1x1xf32, #tpu.memory_space<vmem>>, vector<1x1xf32>
    tpu.vector_store %arg4[%c0_8, %c0_9], %18 {strides = array<i32>} : memref<1x1xf32, #tpu.memory_space<vmem>>, vector<1x1xf32>,
    return
  }
}

</mosaic_0001>

<llo_original>
// kernel: tpu_custom_call.1
$region0: #{tpu_custom_call.1}
  #allocation0 [shape = 'u32[]', space=smem, size = 0x4, offset = 0x4, fixed_abs, tag = 'smem constant byte address 0x4 - core index']
  #allocation1 [shape = 'u32[144,128]{1,0:T(1,128)}', space=vmem, size = 0x12000, scoped, tag = 'internal scratch']
  #allocation2 [shape = 'f32[1]{0:T(128)S(6)}', space=smem, size = 0x200, scoped, tag = 'scoped memory for tpu_custom_call.1']
  %s0 = inlined_call_operand.<no memory space> [shape: f32[1], index: 0, kind: input, shape index: {}]
  %s1 = inlined_call_operand.vmem [shape: f32[3,2], index: 1, kind: input, shape index: {}]
  %s2 = inlined_call_operand.vmem [shape: f32[3,1], index: 2, kind: input, shape index: {}]
  %s3 = inlined_call_operand.vmem [shape: f32[1,2], index: 3, kind: input, shape index: {}]
  %s4 = inlined_call_operand.hbm [shape: f32[1,1], index: 4, kind: output, shape index: {}]
  %s5 = sld [smem:[#allocation0]]
  $region26: #{tpu_custom_call.1} parent=0
    _
  %s7 = ssub.s32 1, %s5
  %s8 = scalar_select 0, %s7, %s5
  %9 = sst [smem:[#allocation2]] %s0
  $region1: #{tpu_custom_call.1} parent=0
    #allocation3 [shape = 'u8[512]{0}', space=vmem, size = 0x400, scoped, tag = 'output window, operand 0, single buffered']
    #allocation4 [shape = 's32[1]{0}', space=sflag, size = 0x4, scoped, tag = 'scoped memory for tpu_custom_call.1']
    %10 = vsyncpa [#allocation4], 0
    // Predicated region
    $region2: #{tpu_custom_call.1} parent=1 // pred_check
      _
    $region3: #{tpu_custom_call.1} parent=1 // pred_check_branch
      %12 = sbr.rel (0) target = $region5
    $region4: #{tpu_custom_call.1} parent=1 // pred_region
      _
    $region5: #{tpu_custom_call.1} parent=1 // pred_fallthru
      _
    // Predicated region
    $region6: #{tpu_custom_call.1} parent=1 // pred_check
      _
    $region7: #{tpu_custom_call.1} parent=1 // pred_check_branch
      %14 = sbr.rel (0) target = $region9
    $region8: #{tpu_custom_call.1} parent=1 // pred_region
      _
    $region9: #{tpu_custom_call.1} parent=1 // pred_fallthru
      _
    // Predicated region
    $region10: #{tpu_custom_call.1} parent=1 // pred_check
      _
    $region11: #{tpu_custom_call.1} parent=1 // pred_check_branch
      %16 = sbr.rel (0) target = $region13
    $region12: #{tpu_custom_call.1} parent=1 // pred_region
      _
    $region13: #{tpu_custom_call.1} parent=1 // pred_fallthru
      _
    // Predicated region
    $region14: #{tpu_custom_call.1} parent=1 // pred_check
      _
    $region15: #{tpu_custom_call.1} parent=1 // pred_check_branch
      %18 = sbr.rel (0) target = $region17
    $region16: #{tpu_custom_call.1} parent=1 // pred_region
      _
    $region17: #{tpu_custom_call.1} parent=1 // pred_fallthru
      _
    %v19 = vld [vmem:[%s1] sm:$0x7]
    %v20 = vld [vmem:[%s2] sm:$0x7]
    %22 = vset.pattern.permute.xlu0 0
    %23 = vperm.xlu0 %22, %v20
    %v24 = vpop.permute.xlu0 %23
    %v26 = vmul.f32 %v19, %v24
    %vm27 = vcmask 10240
    %v28 = vsel %vm27, %v26, 0.0
    %v29 = vrot.slane %v28, 4
    %v30 = vadd.f32 %v28, %v29
    %v31 = vrot.slane %v30, 2
    %v32 = vadd.f32 %v30, %v31
    %v33 = vrot.slane %v32, 1
    %v34 = vadd.f32 %v32, %v33
    %v35 = vld [vmem:[%s3] sm:$0x1]
    %v36 = vsub.f32 %v34, %v35
    %v37 = vmax.f32 %v36, 0.0
    %s38 = sld [smem:[#allocation2]]
    %v39 = vstv %s38
    %v40 = vmul.f32 %v39, %v37
    %v41 = vmul.f32 %v40, %v37
    %vm42 = vcmask 8192
    %v43 = vsel %vm42, %v41, 0.0
    %44 = vadd.xlane.f32.xlu0 %v43
    %v45 = vpop.xlane.xlu0 %44
    %v46 = vrot.slane %v45, 4
    %v47 = vadd.f32 %v45, %v46
    %v48 = vrot.slane %v47, 2
    %v49 = vadd.f32 %v47, %v48
    %v50 = vrot.slane %v49, 1
    %v51 = vadd.f32 %v49, %v50
    %s52 = vtos %v51
    %v53 = vstv %s52
    %vm54 = vcmask 0
    %55 = vst.msk [vmem:[#allocation3] sm:$0x1] %vm54, %v53
    // Predicated region
    $region18: #{tpu_custom_call.1} parent=1 // pred_check
      _
    $region19: #{tpu_custom_call.1} parent=1 // pred_check_branch
      %57 = sbr.rel (0) target = $region21
    $region20: #{tpu_custom_call.1} parent=1 // pred_region
      %s59 = ssub.s32 16, 16
      %60 = vsyncadd [#allocation4], %s59
      %s62 = sshll.u32 [#allocation3], 4
      %s63 = int_to_ptr.vmem [resolvable:$true] %s62
      %65 = dma.vmem_to_hbm [thread:$0]  %s63, 16, %s4, [#allocation4]
    $region21: #{tpu_custom_call.1} parent=1 // pred_fallthru
      _
    // Predicated region
    $region22: #{tpu_custom_call.1} parent=1 // pred_check
      _
    $region23: #{tpu_custom_call.1} parent=1 // pred_check_branch
      %67 = sbr.rel (0) target = $region25
    $region24: #{tpu_custom_call.1} parent=1 // pred_region
      %68 = dma.done [#allocation4], 16
    $region25: #{tpu_custom_call.1} parent=1 // pred_fallthru
      _
    %69 = vsyncpa [#allocation4], 1

</llo_original>
